<compile_context>
chip_gen: v6e
topology: v6e:2x2x1
jax: 0.10.0
libtpu: 0.0.40
codegen_flags: <defaults>
</compile_context>

<pallas_src>
import functools

import jax
import jax.numpy as jnp
from jax.experimental import pallas as pl
from jax.experimental.pallas import tpu as pltpu


def _multihead_kernel(x_ref, w_ref, b_ref, o_ref, *, num_head):
    # x_ref: (b_tile, n, emb)  tokens for this batch tile (f32)
    # w_ref: (emb, emb)        key-projection weight, [in, out], bf16, resident
    # b_ref: (1, emb)          key-projection bias, f32, resident
    # o_ref: (b_tile, n, emb)  lane-dense output block
    bt, n, emb = x_ref.shape
    e = emb // num_head
    scale = 1.0 / (num_head ** 0.5)

    # Fused projection for all heads and all rows of the tile:
    # one (bt*n, emb) x (emb, emb) bf16 MXU matmul, f32 accumulation.
    # (bt, n) -> bt*n is a leading-dim merge only (n is sublane-aligned in the
    # demo shapes), so no relayout.
    x2 = x_ref[...].reshape(bt * n, emb).astype(jnp.bfloat16)
    proj = jnp.dot(x2, w_ref[...], preferred_element_type=jnp.float32)
    proj = proj + b_ref[...]                       # (bt*n, emb) f32
    proj3 = proj.reshape(bt, n, emb)               # (bt, n, emb), leading split

    # Small static loop over heads only (num_head iterations).  Each iteration
    # is one batched einsum over the whole batch tile and stores directly into
    # its lane slice of o_ref, so its intermediates die immediately — no
    # head_outs list, no lane-axis concatenate.
    for h in range(num_head):
        p = proj3[:, :, h * e:(h + 1) * e]         # (bt, n, e) f32, static slice
        p16 = p.astype(jnp.bfloat16)
        # Fold the 1/sqrt(num_head) scale into the q operand (O(n*e)).
        q16 = (p * scale).astype(jnp.bfloat16)

        # scores[b, i, j] = q_i . k_j   with q = k = v = p (module quirk)
        s = jnp.einsum('bqe,bke->bqk', q16, p16,
                       preferred_element_type=jnp.float32)   # (bt, n, n) f32

        # F.softmax(wei, dim=2): dim=2 is the QUERY axis -> axis 1 of (b,q,k).
        m = jnp.max(s, axis=1, keepdims=True)
        ex = jnp.exp(s - m)
        inv = pl.reciprocal(jnp.sum(ex, axis=1, keepdims=True), approx=True)
        wei = ex * inv

        # Dropout(0.1) is identity in eval mode.

        out_h = jnp.einsum('bqk,bke->bqe', wei.astype(jnp.bfloat16), p16,
                           preferred_element_type=jnp.float32)  # (bt, n, e)

        # Direct lane-slice store: 'b h n e -> b n (h e)' happens here.
        o_ref[:, :, h * e:(h + 1) * e] = out_h.astype(o_ref.dtype)


def multihead_forward(x, key_w, key_b, num_head, b_tile=None):
    """x: (b, n, emb); key_w: (emb, emb) PyTorch [out, in]; key_b: (emb,)."""
    b, n, emb = x.shape
    assert emb % num_head == 0

    # Pre-transpose the weight once (free at the XLA level): [out,in]->[in,out]
    # so the in-kernel projection is a plain [M,K]x[K,N] contraction, and cast
    # it to bf16 once (MXU operand dtype + half the resident VMEM footprint).
    w_t = jnp.asarray(key_w).T.astype(jnp.bfloat16)          # (emb_in, emb_out)
    bias = jnp.asarray(key_b).reshape(1, emb).astype(jnp.float32)

    if b_tile is None:
        # Target ~512 projection rows (bt*n) per grid step so the MXU M-dim is
        # well fed on v6e/v7x, then shrink until a conservative VMEM estimate
        # fits (kept well under v7x's 64 MiB physical / 32 MiB scoped default).
        target_rows = 512
        b_tile = max(1, min(b, target_rows // max(n, 1)))
        while b % b_tile:
            b_tile -= 1

        def _vmem_bytes(bt):
            tile = bt * n * emb * 4                 # f32 x / out tile
            proj = bt * n * emb * (4 + 2)           # f32 proj + bf16 copies
            scores = 2 * bt * n * n * 4             # per-head f32 scores (~2 live)
            weight = emb * emb * 2 + emb * 4        # resident bf16 W + f32 bias
            return 2 * tile + 2 * tile + proj + scores + weight  # 2x = dbl-buf

        budget = 24 * 1024 * 1024
        while b_tile > 1 and _vmem_bytes(b_tile) > budget:
            b_tile -= 1
            while b % b_tile:
                b_tile -= 1
        # Note: on v7x (2 TensorCores) an even number of grid steps balances
        # the "parallel" axis; on v5e/v6e the single largest tile is best.

    grid = (b // b_tile,)

    cost = pl.CostEstimate(
        flops=2 * b * n * emb * emb + 4 * b * n * n * emb,
        transcendentals=b * num_head * n * n,
        bytes_accessed=(b * n * emb * 4)            # x
        + (emb * emb * 2) + (emb * 4)               # weight + bias
        + (b * n * emb * 4))                        # out

    return pl.pallas_call(
        functools.partial(_multihead_kernel, num_head=num_head),
        out_shape=jax.ShapeDtypeStruct((b, n, emb), x.dtype),
        grid_spec=pltpu.PrefetchScalarGridSpec(
            num_scalar_prefetch=0,
            grid=grid,
            in_specs=[
                # batch tile of tokens
                pl.BlockSpec((b_tile, n, emb), lambda bi: (bi, 0, 0)),
                # resident bf16 weight: constant block index -> no re-DMA
                pl.BlockSpec((emb, emb), lambda bi: (0, 0)),
                # resident bias
                pl.BlockSpec((1, emb), lambda bi: (0, 0)),
            ],
            # lane-dense output written directly as (b, n, emb)
            out_specs=pl.BlockSpec((b_tile, n, emb), lambda bi: (bi, 0, 0)),
        ),
        compiler_params=pltpu.CompilerParams(
            dimension_semantics=("parallel",),
            vmem_limit_bytes=48 * 1024 * 1024),
        cost_estimate=cost,
    )(x, w_t, bias)


def multihead_ref(x, key_w, key_b, num_head):
    """Pure-JAX f32 reference mirroring the PyTorch forward exactly."""
    b, n, emb = x.shape
    e = emb // num_head
    proj = x @ key_w.T + key_b                                     # (b, n, emb)
    proj = proj.reshape(b, n, num_head, e).transpose(0, 2, 1, 3)   # (b, h, n, e)
    wei = (proj @ jnp.swapaxes(proj, 3, 2)) / (num_head ** 0.5)    # (b, h, n, n)
    wei = jax.nn.softmax(wei, axis=2)                              # dim=2 quirk
    out = wei @ proj                                               # (b, h, n, e)
    return out.transpose(0, 2, 1, 3).reshape(b, n, emb)


if __name__ == "__main__":
    batch, seq, emb, num_head = 2, 8, 32, 4

    key = jax.random.PRNGKey(0)
    kx, kw, kb = jax.random.split(key, 3)

    # Deterministic parameter init (PyTorch nn.Linear-style uniform bound).
    bound = 1.0 / (emb ** 0.5)
    x = jax.random.normal(kx, (batch, seq, emb), dtype=jnp.float32)
    key_w = jax.random.uniform(kw, (emb, emb), jnp.float32, -bound, bound)
    key_b = jax.random.uniform(kb, (emb,), jnp.float32, -bound, bound)

    out = jax.block_until_ready(multihead_forward(x, key_w, key_b, num_head))
    ref = jax.block_until_ready(multihead_ref(x, key_w, key_b, num_head))

    assert out.shape == (batch, seq, emb), out.shape
    # Tolerance accounts for bf16 MXU operands and the EUP approximate
    # reciprocal in the softmax denominator (f32 accumulation throughout).
    err = float(jnp.max(jnp.abs(out - ref)))
    assert jnp.allclose(out, ref, atol=3e-2, rtol=3e-2), err
    print("KERNEL_OK")
</pallas_src>

<mosaic_0001>
module attributes {stable_mosaic.version = 11 : i64} {
  func.func @_multihead_kernel(%arg0: i32, %arg1: memref<2x8x32xf32, #tpu.memory_space<vmem>>, %arg2: memref<32x32xbf16, #tpu.memory_space<vmem>>, %arg3: memref<1x32xf32, #tpu.memory_space<vmem>>, %arg4: memref<2x8x32xf32, #tpu.memory_space<vmem>>) attributes {dimension_semantics = [#tpu.dimension_semantics<parallel>], iteration_bounds = array<i64: 1>, scalar_prefetch = 0 : i64, scratch_operands = 0 : i64, tpu.core_type = #tpu.core_type<tc>, window_params = [{transform_indices = @transform_0, window_bounds = array<i64: 2, 8, 32>}, {pipeline_mode = #tpu.pipeline_mode<synchronous>, transform_indices = @transform_1, window_bounds = array<i64: 32, 32>}, {pipeline_mode = #tpu.pipeline_mode<synchronous>, transform_indices = @transform_2, window_bounds = array<i64: 1, 32>}, {transform_indices = @transform_3, window_bounds = array<i64: 2, 8, 32>}]} {
    %c0 = arith.constant 0 : index
    %c0_0 = arith.constant 0 : index
    %c0_1 = arith.constant 0 : index
    %0 = vector.load %arg1[%c0, %c0_0, %c0_1] : memref<2x8x32xf32, #tpu.memory_space<vmem>>, vector<2x8x32xf32>
    %1 = vector.shape_cast %0 : vector<2x8x32xf32> to vector<16x32xf32>
    %2 = arith.truncf %1 : vector<16x32xf32> to vector<16x32xbf16>
    %c0_2 = arith.constant 0 : index
    %c0_3 = arith.constant 0 : index
    %3 = vector.load %arg2[%c0_2, %c0_3] : memref<32x32xbf16, #tpu.memory_space<vmem>>, vector<32x32xbf16>
    %cst = arith.constant dense<0.000000e+00> : vector<16x32xf32>
    %4 = tpu.matmul %2, %3, %cst {dimension_numbers = #tpu.dot_dimension_numbers<[1], [0], [0], [1], [0, 0, 1, 1], [], []>} : vector<16x32xbf16>, vector<32x32xbf16>, vector<16x32xf32> -> vector<16x32xf32>
    %c0_4 = arith.constant 0 : index
    %c0_5 = arith.constant 0 : index
    %5 = vector.load %arg3[%c0_4, %c0_5] : memref<1x32xf32, #tpu.memory_space<vmem>>, vector<1x32xf32>
    %6 = vector.broadcast %5 : vector<1x32xf32> to vector<16x32xf32>
    %7 = arith.addf %4, %6 : vector<16x32xf32>
    %8 = vector.shape_cast %7 : vector<16x32xf32> to vector<2x8x32xf32>
    %9 = vector.extract_strided_slice %8 {offsets = [0, 0, 0], sizes = [2, 8, 8], strides = [1, 1, 1]} : vector<2x8x32xf32> to vector<2x8x8xf32>
    %10 = arith.truncf %9 : vector<2x8x8xf32> to vector<2x8x8xbf16>
    %cst_6 = arith.constant 5.000000e-01 : f32
    %11 = vector.broadcast %cst_6 : f32 to vector<2x8x8xf32>
    %12 = arith.mulf %9, %11 : vector<2x8x8xf32>
    %13 = arith.truncf %12 : vector<2x8x8xf32> to vector<2x8x8xbf16>
    "tpu.trace_start"() <{level = 10 : i32, message = "bqe,bke->bqk"}> : () -> ()
    %cst_7 = arith.constant dense<0.000000e+00> : vector<2x8x8xf32>
    %14 = tpu.matmul %13, %10, %cst_7 {dimension_numbers = #tpu.dot_dimension_numbers<[2], [2], [1], [1], [0, 0, 0, 1, 1, 1], [0], [0]>} : vector<2x8x8xbf16>, vector<2x8x8xbf16>, vector<2x8x8xf32> -> vector<2x8x8xf32>
    "tpu.trace_stop"() : () -> ()
    %cst_8 = arith.constant dense<0xFF800000> : vector<2x8xf32>
    %15 = vector.multi_reduction <maximumf>, %14, %cst_8 [1] : vector<2x8x8xf32> to vector<2x8xf32>
    %16 = vector.shape_cast %15 : vector<2x8xf32> to vector<2x1x8xf32>
    %17 = vector.broadcast %16 : vector<2x1x8xf32> to vector<2x8x8xf32>
    %18 = arith.subf %14, %17 : vector<2x8x8xf32>
    %19 = math.exp %18 : vector<2x8x8xf32>
    %cst_9 = arith.constant dense<0.000000e+00> : vector<2x8xf32>
    %20 = vector.multi_reduction <add>, %19, %cst_9 [1] : vector<2x8x8xf32> to vector<2x8xf32>
    %21 = vector.shape_cast %20 : vector<2x8xf32> to vector<2x1x8xf32>
    %22 = tpu.reciprocal %21 {approx = true} : vector<2x1x8xf32> -> vector<2x1x8xf32>
    %23 = vector.broadcast %22 : vector<2x1x8xf32> to vector<2x8x8xf32>
    %24 = arith.mulf %19, %23 : vector<2x8x8xf32>
    %25 = arith.truncf %24 : vector<2x8x8xf32> to vector<2x8x8xbf16>
    "tpu.trace_start"() <{level = 10 : i32, message = "bqk,bke->bqe"}> : () -> ()
    %cst_10 = arith.constant dense<0.000000e+00> : vector<2x8x8xf32>
    %26 = tpu.matmul %25, %10, %cst_10 {dimension_numbers = #tpu.dot_dimension_numbers<[2], [1], [1], [2], [0, 0, 0, 1, 1, 2], [0], [0]>} : vector<2x8x8xbf16>, vector<2x8x8xbf16>, vector<2x8x8xf32> -> vector<2x8x8xf32>
    "tpu.trace_stop"() : () -> ()
    %c0_11 = arith.constant 0 : index
    %c0_12 = arith.constant 0 : index
    %c0_13 = arith.constant 0 : index
    %27 = vector.load %arg4[%c0_11, %c0_12, %c0_13] : memref<2x8x32xf32, #tpu.memory_space<vmem>>, vector<2x8x8xf32>
    tpu.vector_store %arg4[%c0_11, %c0_12, %c0_13], %26 {strides = array<i32>} : memref<2x8x32xf32, #tpu.memory_space<vmem>>, vector<2x8x8xf32>,
    %28 = vector.extract_strided_slice %8 {offsets = [0, 0, 8], sizes = [2, 8, 8], strides = [1, 1, 1]} : vector<2x8x32xf32> to vector<2x8x8xf32>
    %29 = arith.truncf %28 : vector<2x8x8xf32> to vector<2x8x8xbf16>
    %cst_14 = arith.constant 5.000000e-01 : f32
    %30 = vector.broadcast %cst_14 : f32 to vector<2x8x8xf32>
    %31 = arith.mulf %28, %30 : vector<2x8x8xf32>
    %32 = arith.truncf %31 : vector<2x8x8xf32> to vector<2x8x8xbf16>
    "tpu.trace_start"() <{level = 10 : i32, message = "bqe,bke->bqk"}> : () -> ()
    %cst_15 = arith.constant dense<0.000000e+00> : vector<2x8x8xf32>
    %33 = tpu.matmul %32, %29, %cst_15 {dimension_numbers = #tpu.dot_dimension_numbers<[2], [2], [1], [1], [0, 0, 0, 1, 1, 1], [0], [0]>} : vector<2x8x8xbf16>, vector<2x8x8xbf16>, vector<2x8x8xf32> -> vector<2x8x8xf32>
    "tpu.trace_stop"() : () -> ()
    %cst_16 = arith.constant dense<0xFF800000> : vector<2x8xf32>
    %34 = vector.multi_reduction <maximumf>, %33, %cst_16 [1] : vector<2x8x8xf32> to vector<2x8xf32>
    %35 = vector.shape_cast %34 : vector<2x8xf32> to vector<2x1x8xf32>
    %36 = vector.broadcast %35 : vector<2x1x8xf32> to vector<2x8x8xf32>
    %37 = arith.subf %33, %36 : vector<2x8x8xf32>
    %38 = math.exp %37 : vector<2x8x8xf32>
    %cst_17 = arith.constant dense<0.000000e+00> : vector<2x8xf32>
    %39 = vector.multi_reduction <add>, %38, %cst_17 [1] : vector<2x8x8xf32> to vector<2x8xf32>
    %40 = vector.shape_cast %39 : vector<2x8xf32> to vector<2x1x8xf32>
    %41 = tpu.reciprocal %40 {approx = true} : vector<2x1x8xf32> -> vector<2x1x8xf32>
    %42 = vector.broadcast %41 : vector<2x1x8xf32> to vector<2x8x8xf32>
    %43 = arith.mulf %38, %42 : vector<2x8x8xf32>
    %44 = arith.truncf %43 : vector<2x8x8xf32> to vector<2x8x8xbf16>
    "tpu.trace_start"() <{level = 10 : i32, message = "bqk,bke->bqe"}> : () -> ()
    %cst_18 = arith.constant dense<0.000000e+00> : vector<2x8x8xf32>
    %45 = tpu.matmul %44, %29, %cst_18 {dimension_numbers = #tpu.dot_dimension_numbers<[2], [1], [1], [2], [0, 0, 0, 1, 1, 2], [0], [0]>} : vector<2x8x8xbf16>, vector<2x8x8xbf16>, vector<2x8x8xf32> -> vector<2x8x8xf32>
    "tpu.trace_stop"() : () -> ()
    %c0_19 = arith.constant 0 : index
    %c0_20 = arith.constant 0 : index
    %c8 = arith.constant 8 : index
    %46 = vector.load %arg4[%c0_19, %c0_20, %c8] : memref<2x8x32xf32, #tpu.memory_space<vmem>>, vector<2x8x8xf32>
    tpu.vector_store %arg4[%c0_19, %c0_20, %c8], %45 {strides = array<i32>} : memref<2x8x32xf32, #tpu.memory_space<vmem>>, vector<2x8x8xf32>,
    %47 = vector.extract_strided_slice %8 {offsets = [0, 0, 16], sizes = [2, 8, 8], strides = [1, 1, 1]} : vector<2x8x32xf32> to vector<2x8x8xf32>
    %48 = arith.truncf %47 : vector<2x8x8xf32> to vector<2x8x8xbf16>
    %cst_21 = arith.constant 5.000000e-01 : f32
    %49 = vector.broadcast %cst_21 : f32 to vector<2x8x8xf32>
    %50 = arith.mulf %47, %49 : vector<2x8x8xf32>
    %51 = arith.truncf %50 : vector<2x8x8xf32> to vector<2x8x8xbf16>
    "tpu.trace_start"() <{level = 10 : i32, message = "bqe,bke->bqk"}> : () -> ()
    %cst_22 = arith.constant dense<0.000000e+00> : vector<2x8x8xf32>
    %52 = tpu.matmul %51, %48, %cst_22 {dimension_numbers = #tpu.dot_dimension_numbers<[2], [2], [1], [1], [0, 0, 0, 1, 1, 1], [0], [0]>} : vector<2x8x8xbf16>, vector<2x8x8xbf16>, vector<2x8x8xf32> -> vector<2x8x8xf32>
    "tpu.trace_stop"() : () -> ()
    %cst_23 = arith.constant dense<0xFF800000> : vector<2x8xf32>
    %53 = vector.multi_reduction <maximumf>, %52, %cst_23 [1] : vector<2x8x8xf32> to vector<2x8xf32>
    %54 = vector.shape_cast %53 : vector<2x8xf32> to vector<2x1x8xf32>
    %55 = vector.broadcast %54 : vector<2x1x8xf32> to vector<2x8x8xf32>
    %56 = arith.subf %52, %55 : vector<2x8x8xf32>
    %57 = math.exp %56 : vector<2x8x8xf32>
    %cst_24 = arith.constant dense<0.000000e+00> : vector<2x8xf32>
    %58 = vector.multi_reduction <add>, %57, %cst_24 [1] : vector<2x8x8xf32> to vector<2x8xf32>
    %59 = vector.shape_cast %58 : vector<2x8xf32> to vector<2x1x8xf32>
    %60 = tpu.reciprocal %59 {approx = true} : vector<2x1x8xf32> -> vector<2x1x8xf32>
    %61 = vector.broadcast %60 : vector<2x1x8xf32> to vector<2x8x8xf32>
    %62 = arith.mulf %57, %61 : vector<2x8x8xf32>
    %63 = arith.truncf %62 : vector<2x8x8xf32> to vector<2x8x8xbf16>
    "tpu.trace_start"() <{level = 10 : i32, message = "bqk,bke->bqe"}> : () -> ()
    %cst_25 = arith.constant dense<0.000000e+00> : vector<2x8x8xf32>
    %64 = tpu.matmul %63, %48, %cst_25 {dimension_numbers = #tpu.dot_dimension_numbers<[2], [1], [1], [2], [0, 0, 0, 1, 1, 2], [0], [0]>} : vector<2x8x8xbf16>, vector<2x8x8xbf16>, vector<2x8x8xf32> -> vector<2x8x8xf32>
    "tpu.trace_stop"() : () -> ()
    %c0_26 = arith.constant 0 : index
    %c0_27 = arith.constant 0 : index
    %c16 = arith.constant 16 : index
    %65 = vector.load %arg4[%c0_26, %c0_27, %c16] : memref<2x8x32xf32, #tpu.memory_space<vmem>>, vector<2x8x8xf32>
    tpu.vector_store %arg4[%c0_26, %c0_27, %c16], %64 {strides = array<i32>} : memref<2x8x32xf32, #tpu.memory_space<vmem>>, vector<2x8x8xf32>,
    %66 = vector.extract_strided_slice %8 {offsets = [0, 0, 24], sizes = [2, 8, 8], strides = [1, 1, 1]} : vector<2x8x32xf32> to vector<2x8x8xf32>
    %67 = arith.truncf %66 : vector<2x8x8xf32> to vector<2x8x8xbf16>
    %cst_28 = arith.constant 5.000000e-01 : f32
    %68 = vector.broadcast %cst_28 : f32 to vector<2x8x8xf32>
    %69 = arith.mulf %66, %68 : vector<2x8x8xf32>
    %70 = arith.truncf %69 : vector<2x8x8xf32> to vector<2x8x8xbf16>
    "tpu.trace_start"() <{level = 10 : i32, message = "bqe,bke->bqk"}> : () -> ()
    %cst_29 = arith.constant dense<0.000000e+00> : vector<2x8x8xf32>
    %71 = tpu.matmul %70, %67, %cst_29 {dimension_numbers = #tpu.dot_dimension_numbers<[2], [2], [1], [1], [0, 0, 0, 1, 1, 1], [0], [0]>} : vector<2x8x8xbf16>, vector<2x8x8xbf16>, vector<2x8x8xf32> -> vector<2x8x8xf32>
    "tpu.trace_stop"() : () -> ()
    %cst_30 = arith.constant dense<0xFF800000> : vector<2x8xf32>
    %72 = vector.multi_reduction <maximumf>, %71, %cst_30 [1] : vector<2x8x8xf32> to vector<2x8xf32>
    %73 = vector.shape_cast %72 : vector<2x8xf32> to vector<2x1x8xf32>
    %74 = vector.broadcast %73 : vector<2x1x8xf32> to vector<2x8x8xf32>
    %75 = arith.subf %71, %74 : vector<2x8x8xf32>
    %76 = math.exp %75 : vector<2x8x8xf32>
    %cst_31 = arith.constant dense<0.000000e+00> : vector<2x8xf32>
    %77 = vector.multi_reduction <add>, %76, %cst_31 [1] : vector<2x8x8xf32> to vector<2x8xf32>
    %78 = vector.shape_cast %77 : vector<2x8xf32> to vector<2x1x8xf32>
    %79 = tpu.reciprocal %78 {approx = true} : vector<2x1x8xf32> -> vector<2x1x8xf32>
    %80 = vector.broadcast %79 : vector<2x1x8xf32> to vector<2x8x8xf32>
    %81 = arith.mulf %76, %80 : vector<2x8x8xf32>
    %82 = arith.truncf %81 : vector<2x8x8xf32> to vector<2x8x8xbf16>
    "tpu.trace_start"() <{level = 10 : i32, message = "bqk,bke->bqe"}> : () -> ()
    %cst_32 = arith.constant dense<0.000000e+00> : vector<2x8x8xf32>
    %83 = tpu.matmul %82, %67, %cst_32 {dimension_numbers = #tpu.dot_dimension_numbers<[2], [1], [1], [2], [0, 0, 0, 1, 1, 2], [0], [0]>} : vector<2x8x8xbf16>, vector<2x8x8xbf16>, vector<2x8x8xf32> -> vector<2x8x8xf32>
    "tpu.trace_stop"() : () -> ()
    %c0_33 = arith.constant 0 : index
    %c0_34 = arith.constant 0 : index
    %c24 = arith.constant 24 : index
    %84 = vector.load %arg4[%c0_33, %c0_34, %c24] : memref<2x8x32xf32, #tpu.memory_space<vmem>>, vector<2x8x8xf32>
    tpu.vector_store %arg4[%c0_33, %c0_34, %c24], %83 {strides = array<i32>} : memref<2x8x32xf32, #tpu.memory_space<vmem>>, vector<2x8x8xf32>,
    return
  }
  func.func @transform_0(%arg0: i32) -> (i32, i32, i32) {
    %c0_i32 = arith.constant 0 : i32
    %c0_i32_0 = arith.constant 0 : i32
    %c0_i32_1 = arith.constant 0 : i32
    return %arg0, %c0_i32, %c0_i32_0 : i32, i32, i32
  }
  func.func @transform_1(%arg0: i32) -> (i32, i32) {
    %c0_i32 = arith.constant 0 : i32
    %c0_i32_0 = arith.constant 0 : i32
    %c0_i32_1 = arith.constant 0 : i32
    return %c0_i32, %c0_i32_0 : i32, i32
  }
  func.func @transform_2(%arg0: i32) -> (i32, i32) {
    %c0_i32 = arith.constant 0 : i32
    %c0_i32_0 = arith.constant 0 : i32
    %c0_i32_1 = arith.constant 0 : i32
    return %c0_i32, %c0_i32_0 : i32, i32
  }
  func.func @transform_3(%arg0: i32) -> (i32, i32, i32) {
    %c0_i32 = arith.constant 0 : i32
    %c0_i32_0 = arith.constant 0 : i32
    %c0_i32_1 = arith.constant 0 : i32
    return %arg0, %c0_i32, %c0_i32_0 : i32, i32, i32
  }
}

</mosaic_0001>

<llo_original>
// kernel: tpu_custom_call.1
$region0: #{tpu_custom_call.1}
  #allocation0 [shape = 'u32[]', space=smem, size = 0x4, offset = 0x4, fixed_abs, tag = 'smem constant byte address 0x4 - core index']
  #allocation1 [shape = 'u32[144,128]{1,0:T(1,128)}', space=vmem, size = 0x12000, scoped, tag = 'internal scratch']
  %s0 = inlined_call_operand.hbm [shape: f32[2,8,32], index: 0, kind: input, shape index: {}]
  %s1 = inlined_call_operand.hbm [shape: bf16[32,32], index: 1, kind: input, shape index: {}]
  %s2 = inlined_call_operand.vmem [shape: f32[1,32], index: 2, kind: input, shape index: {}]
  %s3 = inlined_call_operand.hbm [shape: f32[2,8,32], index: 3, kind: output, shape index: {}]
  %s4 = sld [smem:[#allocation0]]
  $region30: #{tpu_custom_call.1} parent=0
    _
  %s6 = ssub.s32 1, %s4
  %s7 = scalar_select 0, %s6, %s4
  $region1: #{tpu_custom_call.1} parent=0
    #allocation2 [shape = 'u8[8192]{0}', space=vmem, size = 0x2000, scoped, tag = 'input window, operand 0, single buffered']
    #allocation3 [shape = 's32[1]{0}', space=sflag, size = 0x4, scoped, tag = 'scoped memory for tpu_custom_call.1']
    #allocation4 [shape = 's32[1]{0}', space=sflag, size = 0x4, scoped, tag = 'scoped memory for tpu_custom_call.1']
    #allocation5 [shape = 'u8[8192]{0}', space=vmem, size = 0x2000, scoped, tag = 'input window, operand 1, single buffered']
    #allocation6 [shape = 's32[1]{0}', space=sflag, size = 0x4, scoped, tag = 'scoped memory for tpu_custom_call.1']
    #allocation7 [shape = 'u8[8192]{0}', space=vmem, size = 0x2000, scoped, tag = 'output window, operand 0, single buffered']
    %8 = vsyncpa [#allocation3], 0
    %9 = vsyncpa [#allocation6], 0
    %10 = vsyncpa [#allocation4], 0
    // Predicated region
    $region2: #{tpu_custom_call.1} parent=1 // pred_check
      _
    $region3: #{tpu_custom_call.1} parent=1 // pred_check_branch
      %12 = sbr.rel (0) target = $region5
    $region4: #{tpu_custom_call.1} parent=1 // pred_region
      %s14 = ssub.s32 256, 256
      %15 = vsyncadd [#allocation3], %s14
      %s16 = sshll.u32 [#allocation2], 4
      %s17 = int_to_ptr.vmem [resolvable:$true] %s16
      %22 = dma.hbm_to_vmem [thread:$0]  %s0, 256, %s17, [#allocation3], 128, 128, 8
    $region5: #{tpu_custom_call.1} parent=1 // pred_fallthru
      _
    // Predicated region
    $region6: #{tpu_custom_call.1} parent=1 // pred_check
      _
    $region7: #{tpu_custom_call.1} parent=1 // pred_check_branch
      %24 = sbr.rel (0) target = $region9
    $region8: #{tpu_custom_call.1} parent=1 // pred_region
      %s26 = ssub.s32 256, 256
      %27 = vsyncadd [#allocation6], %s26
      %s28 = sshll.u32 [#allocation5], 4
      %s29 = int_to_ptr.vmem [resolvable:$true] %s28
      %34 = dma.hbm_to_vmem [thread:$0]  %s1, 256, %s29, [#allocation6], 64, 64, 4
    $region9: #{tpu_custom_call.1} parent=1 // pred_fallthru
      _
    // Predicated region
    $region10: #{tpu_custom_call.1} parent=1 // pred_check
      _
    $region11: #{tpu_custom_call.1} parent=1 // pred_check_branch
      %36 = sbr.rel (0) target = $region13
    $region12: #{tpu_custom_call.1} parent=1 // pred_region
      _
    $region13: #{tpu_custom_call.1} parent=1 // pred_fallthru
      _
    // Predicated region
    $region14: #{tpu_custom_call.1} parent=1 // pred_check
      _
    $region15: #{tpu_custom_call.1} parent=1 // pred_check_branch
      %38 = sbr.rel (0) target = $region17
    $region16: #{tpu_custom_call.1} parent=1 // pred_region
      %39 = dma.done [#allocation3], 256
    $region17: #{tpu_custom_call.1} parent=1 // pred_fallthru
      _
    // Predicated region
    $region18: #{tpu_custom_call.1} parent=1 // pred_check
      _
    $region19: #{tpu_custom_call.1} parent=1 // pred_check_branch
      %41 = sbr.rel (0) target = $region21
    $region20: #{tpu_custom_call.1} parent=1 // pred_region
      %42 = dma.done [#allocation6], 256
    $region21: #{tpu_custom_call.1} parent=1 // pred_fallthru
      _
    %v44 = vld [vmem:[#allocation2] sm:$0xff]
    %v45 = vld [vmem:[#allocation2 + $0x8] sm:$0xff]
    %v46 = vpack.c.bf16 %v45, %v44
    %v47 = vld [vmem:[#allocation5] sm:$0xf]
    %v48 = vld [vmem:[#allocation5 + $0x4] sm:$0xf]
    %v49 = vld [vmem:[#allocation5 + $0x8] sm:$0xf]
    %v50 = vld [vmem:[#allocation5 + $0xc] sm:$0xf]
    %v51 = vld [vmem:[%s2] sm:$0x1]
    %v53 = vlaneseq
    %v54 = vshrl.u32 %v53, 7
    %v55 = vsub.s32 0, %v54
    %v56 = vrot.slane %v51, %v55
    %v62 = vunpack.c.l.b16 %v47
    %v63 = vunpack.c.l.b16 %v48
    %v64 = vunpack.c.l.b16 %v49
    %v65 = vunpack.c.l.b16 %v50
    %v66 = vpack.c.b16 %v63, %v62
    %v67 = vpack.c.b16 %v65, %v64
    %vm70 = vcmask 261120
    %v72 = vsel %vm70, %v46, 0
    %74 = vmatprep.subr.bf16.mxu0 0
    %75 = vmatpush1.bf16.msra.mxu0 0
    %76 = vmatprep.subr.bf16.mxu0 0
    %77 = vmatpush1.bf16.msra.mxu0 0
    %78 = vmatprep.subr.bf16.mxu0 0
    %79 = vmatpush1.bf16.msra.mxu0 0
    %80 = vmatprep.subr.bf16.mxu0 0
    %81 = vmatpush1.bf16.msra.mxu0 0
    %82 = vmatprep.subr.bf16.mxu0 0
    %83 = vmatpush1.bf16.msra.mxu0 0
    %84 = vmatprep.subr.bf16.mxu0 0
    %85 = vmatpush1.bf16.msra.mxu0 0
    %86 = vmatprep.subr.bf16.mxu0 0
    %87 = vmatpush1.bf16.msra.mxu0 %v67
    %88 = vmatprep.subr.bf16.mxu0 0
    %89 = vmatpush1.bf16.msra.mxu0 %v66
    %90 = vmatprep.subr.bf16.mxu0 0
    %91 = vmatpush2.bf16.msra.mxu0 0
    %92 = vmatprep.subr.bf16.mxu0 0
    %93 = vmatpush2.bf16.msra.mxu0 0
    %94 = vmatprep.subr.bf16.mxu0 0
    %95 = vmatpush2.bf16.msra.mxu0 0
    %96 = vmatprep.subr.bf16.mxu0 0
    %97 = vmatpush2.bf16.msra.mxu0 0
    %98 = vmatprep.subr.bf16.mxu0 0
    %99 = vmatpush2.bf16.msra.mxu0 0
    %100 = vmatprep.subr.bf16.mxu0 0
    %101 = vmatpush2.bf16.msra.mxu0 0
    %102 = vmatprep.subr.bf16.mxu0 0
    %103 = vmatpush2.bf16.msra.mxu0 0
    %104 = vmatprep.subr.bf16.mxu0 0
    %105 = vmatpush2.bf16.msra.mxu0 0
    %106 = vmatprep.mubr.bf16.mxu0 0
    %107 = vmatmul.mubr.bf16.gmra.mxu0 %v72
    %v108 = vpop.f32.mrf.mxu0
    %v109 = vadd.f32 %v56, %v108
    %v110 = vpop.f32.mrf.mxu0
    %v111 = vpop.f32.mrf.mxu0
    %v112 = vadd.f32 %v56, %v111
    %v113 = vpop.f32.mrf.mxu0
    %114 = vdwg.mxu0
    %v115 = vpack.c.bf16 %v109, %v109
    %v116 = vpack.c.bf16 %v112, %v112
    %v117 = vmul.f32 %v109, 0.5
    %v118 = vmul.f32 %v112, 0.5
    %v119 = vpack.c.bf16 %v117, %v117
    %v120 = vpack.c.bf16 %v118, %v118
    %vm121 = vcmask 64512
    %v123 = vsel %vm121, %v119, 0
    %v126 = vsel %vm121, %v115, 0
    %128 = vmatprep.subr.bf16.mxu0 0
    %129 = vmatpush1.bf16.xpose.msra.mxu0 0
    %130 = vmatprep.subr.bf16.mxu0 0
    %131 = vmatpush1.bf16.xpose.msra.mxu0 0
    %132 = vmatprep.subr.bf16.mxu0 0
    %133 = vmatpush1.bf16.xpose.msra.mxu0 0
    %134 = vmatprep.subr.bf16.mxu0 0
    %135 = vmatpush1.bf16.xpose.msra.mxu0 0
    %136 = vmatprep.subr.bf16.mxu0 0
    %137 = vmatpush1.bf16.xpose.msra.mxu0 0
    %138 = vmatprep.subr.bf16.mxu0 0
    %139 = vmatpush1.bf16.xpose.msra.mxu0 0
    %140 = vmatprep.subr.bf16.mxu0 0
    %141 = vmatpush1.bf16.xpose.msra.mxu0 0
    %142 = vmatprep.subr.bf16.mxu0 0
    %143 = vmatpush1.bf16.xpose.msra.mxu0 %v126
    %144 = vmatprep.subr.bf16.mxu0 0
    %145 = vmatpush2.bf16.xpose.msra.mxu0 0
    %146 = vmatprep.subr.bf16.mxu0 0
    %147 = vmatpush2.bf16.xpose.msra.mxu0 0
    %148 = vmatprep.subr.bf16.mxu0 0
    %149 = vmatpush2.bf16.xpose.msra.mxu0 0
    %150 = vmatprep.subr.bf16.mxu0 0
    %151 = vmatpush2.bf16.xpose.msra.mxu0 0
    %152 = vmatprep.subr.bf16.mxu0 0
    %153 = vmatpush2.bf16.xpose.msra.mxu0 0
    %154 = vmatprep.subr.bf16.mxu0 0
    %155 = vmatpush2.bf16.xpose.msra.mxu0 0
    %156 = vmatprep.subr.bf16.mxu0 0
    %157 = vmatpush2.bf16.xpose.msra.mxu0 0
    %158 = vmatprep.subr.bf16.mxu0 0
    %159 = vmatpush2.bf16.xpose.msra.mxu0 0
    %160 = vmatprep.mubr.bf16.mxu0 0
    %161 = vmatmul.mubr.bf16.gmra.mxu0 %v123
    %v162 = vpop.f32.mrf.mxu0
    %v163 = vadd.f32 0.0, %v162
    %v164 = vpop.f32.mrf.mxu0
    %v165 = vpop.f32.mrf.mxu0
    %v166 = vpop.f32.mrf.mxu0
    %167 = vdwg.mxu0
    %v169 = vsel %vm121, %v120, 0
    %v172 = vsel %vm121, %v116, 0
    %174 = vmatprep.subr.bf16.mxu0 0
    %175 = vmatpush1.bf16.xpose.msra.mxu0 0
    %176 = vmatprep.subr.bf16.mxu0 0
    %177 = vmatpush1.bf16.xpose.msra.mxu0 0
    %178 = vmatprep.subr.bf16.mxu0 0
    %179 = vmatpush1.bf16.xpose.msra.mxu0 0
    %180 = vmatprep.subr.bf16.mxu0 0
    %181 = vmatpush1.bf16.xpose.msra.mxu0 0
    %182 = vmatprep.subr.bf16.mxu0 0
    %183 = vmatpush1.bf16.xpose.msra.mxu0 0
    %184 = vmatprep.subr.bf16.mxu0 0
    %185 = vmatpush1.bf16.xpose.msra.mxu0 0
    %186 = vmatprep.subr.bf16.mxu0 0
    %187 = vmatpush1.bf16.xpose.msra.mxu0 0
    %188 = vmatprep.subr.bf16.mxu0 0
    %189 = vmatpush1.bf16.xpose.msra.mxu0 %v172
    %190 = vmatprep.subr.bf16.mxu0 0
    %191 = vmatpush2.bf16.xpose.msra.mxu0 0
    %192 = vmatprep.subr.bf16.mxu0 0
    %193 = vmatpush2.bf16.xpose.msra.mxu0 0
    %194 = vmatprep.subr.bf16.mxu0 0
    %195 = vmatpush2.bf16.xpose.msra.mxu0 0
    %196 = vmatprep.subr.bf16.mxu0 0
    %197 = vmatpush2.bf16.xpose.msra.mxu0 0
    %198 = vmatprep.subr.bf16.mxu0 0
    %199 = vmatpush2.bf16.xpose.msra.mxu0 0
    %200 = vmatprep.subr.bf16.mxu0 0
    %201 = vmatpush2.bf16.xpose.msra.mxu0 0
    %202 = vmatprep.subr.bf16.mxu0 0
    %203 = vmatpush2.bf16.xpose.msra.mxu0 0
    %204 = vmatprep.subr.bf16.mxu0 0
    %205 = vmatpush2.bf16.xpose.msra.mxu0 0
    %206 = vmatprep.mubr.bf16.mxu0 0
    %207 = vmatmul.mubr.bf16.gmra.mxu0 %v169
    %v208 = vpop.f32.mrf.mxu0
    %v209 = vadd.f32 0.0, %v208
    %v210 = vpop.f32.mrf.mxu0
    %v211 = vpop.f32.mrf.mxu0
    %v212 = vpop.f32.mrf.mxu0
    %213 = vdwg.mxu0
    %v214 = vsel %vm121, %v163, -inf
    %v215 = vrot.slane %v214, 4
    %v216 = vmax.f32 %v214, %v215
    %v217 = vrot.slane %v216, 2
    %v218 = vmax.f32 %v216, %v217
    %v219 = vrot.slane %v218, 1
    %v220 = vmax.f32 %v218, %v219
    %v221 = vsel %vm121, %v209, -inf
    %v222 = vrot.slane %v221, 4
    %v223 = vmax.f32 %v221, %v222
    %v224 = vrot.slane %v223, 2
    %v225 = vmax.f32 %v223, %v224
    %v226 = vrot.slane %v225, 1
    %v227 = vmax.f32 %v225, %v226
    %v228 = vsub.f32 %v163, %v220
    %v229 = vsub.f32 %v209, %v227
    %v230 = vmul.f32 %v228, 1.442695
    %v231 = vpow.pop %v230
    %v232 = vmul.f32 %v229, 1.442695
    %v233 = vpow.pop %v232
    %v234 = vsel %vm121, %v231, 0.0
    %v235 = vrot.slane %v234, 4
    %v236 = vadd.f32 %v234, %v235
    %v237 = vrot.slane %v236, 2
    %v238 = vadd.f32 %v236, %v237
    %v239 = vrot.slane %v238, 1
    %v240 = vadd.f32 %v238, %v239
    %v241 = vsel %vm121, %v233, 0.0
    %v242 = vrot.slane %v241, 4
    %v243 = vadd.f32 %v241, %v242
    %v244 = vrot.slane %v243, 2
    %v245 = vadd.f32 %v243, %v244
    %v246 = vrot.slane %v245, 1
    %v247 = vadd.f32 %v245, %v246
    %v248 = vrcp.pop %v240
    %v249 = vrcp.pop %v247
    %v250 = vmul.f32 %v231, %v248
    %v251 = vmul.f32 %v233, %v249
    %v252 = vpack.c.bf16 %v250, %v250
    %v253 = vpack.c.bf16 %v251, %v251
    %v255 = vsel %vm121, %v252, 0
    %vm257 = vcmask 1043456
    %v258 = vsel %vm257, %v115, 0
    %260 = vmatprep.subr.bf16.mxu0 0
    %261 = vmatpush1.bf16.msra.mxu0 0
    %262 = vmatprep.subr.bf16.mxu0 0
    %263 = vmatpush1.bf16.msra.mxu0 0
    %264 = vmatprep.subr.bf16.mxu0 0
    %265 = vmatpush1.bf16.msra.mxu0 0
    %266 = vmatprep.subr.bf16.mxu0 0
    %267 = vmatpush1.bf16.msra.mxu0 0
    %268 = vmatprep.subr.bf16.mxu0 0
    %269 = vmatpush1.bf16.msra.mxu0 0
    %270 = vmatprep.subr.bf16.mxu0 0
    %271 = vmatpush1.bf16.msra.mxu0 0
    %272 = vmatprep.subr.bf16.mxu0 0
    %273 = vmatpush1.bf16.msra.mxu0 0
    %274 = vmatprep.subr.bf16.mxu0 0
    %275 = vmatpush1.bf16.msra.mxu0 %v258
    %276 = vmatprep.subr.bf16.mxu0 0
    %277 = vmatpush2.bf16.msra.mxu0 0
    %278 = vmatprep.subr.bf16.mxu0 0
    %279 = vmatpush2.bf16.msra.mxu0 0
    %280 = vmatprep.subr.bf16.mxu0 0
    %281 = vmatpush2.bf16.msra.mxu0 0
    %282 = vmatprep.subr.bf16.mxu0 0
    %283 = vmatpush2.bf16.msra.mxu0 0
    %284 = vmatprep.subr.bf16.mxu0 0
    %285 = vmatpush2.bf16.msra.mxu0 0
    %286 = vmatprep.subr.bf16.mxu0 0
    %287 = vmatpush2.bf16.msra.mxu0 0
    %288 = vmatprep.subr.bf16.mxu0 0
    %289 = vmatpush2.bf16.msra.mxu0 0
    %290 = vmatprep.subr.bf16.mxu0 0
    %291 = vmatpush2.bf16.msra.mxu0 0
    %292 = vmatprep.mubr.bf16.mxu0 0
    %293 = vmatmul.mubr.bf16.gmra.mxu0 %v255
    %v294 = vpop.f32.mrf.mxu0
    %v295 = vadd.f32 0.0, %v294
    %v296 = vpop.f32.mrf.mxu0
    %v297 = vpop.f32.mrf.mxu0
    %v298 = vpop.f32.mrf.mxu0
    %299 = vdwg.mxu0
    %v301 = vsel %vm121, %v253, 0
    %v303 = vsel %vm257, %v116, 0
    %305 = vmatprep.subr.bf16.mxu0 0
    %306 = vmatpush1.bf16.msra.mxu0 0
    %307 = vmatprep.subr.bf16.mxu0 0
    %308 = vmatpush1.bf16.msra.mxu0 0
    %309 = vmatprep.subr.bf16.mxu0 0
    %310 = vmatpush1.bf16.msra.mxu0 0
    %311 = vmatprep.subr.bf16.mxu0 0
    %312 = vmatpush1.bf16.msra.mxu0 0
    %313 = vmatprep.subr.bf16.mxu0 0
    %314 = vmatpush1.bf16.msra.mxu0 0
    %315 = vmatprep.subr.bf16.mxu0 0
    %316 = vmatpush1.bf16.msra.mxu0 0
    %317 = vmatprep.subr.bf16.mxu0 0
    %318 = vmatpush1.bf16.msra.mxu0 0
    %319 = vmatprep.subr.bf16.mxu0 0
    %320 = vmatpush1.bf16.msra.mxu0 %v303
    %321 = vmatprep.subr.bf16.mxu0 0
    %322 = vmatpush2.bf16.msra.mxu0 0
    %323 = vmatprep.subr.bf16.mxu0 0
    %324 = vmatpush2.bf16.msra.mxu0 0
    %325 = vmatprep.subr.bf16.mxu0 0
    %326 = vmatpush2.bf16.msra.mxu0 0
    %327 = vmatprep.subr.bf16.mxu0 0
    %328 = vmatpush2.bf16.msra.mxu0 0
    %329 = vmatprep.subr.bf16.mxu0 0
    %330 = vmatpush2.bf16.msra.mxu0 0
    %331 = vmatprep.subr.bf16.mxu0 0
    %332 = vmatpush2.bf16.msra.mxu0 0
    %333 = vmatprep.subr.bf16.mxu0 0
    %334 = vmatpush2.bf16.msra.mxu0 0
    %335 = vmatprep.subr.bf16.mxu0 0
    %336 = vmatpush2.bf16.msra.mxu0 0
    %337 = vmatprep.mubr.bf16.mxu0 0
    %338 = vmatmul.mubr.bf16.gmra.mxu0 %v301
    %v339 = vpop.f32.mrf.mxu0
    %v340 = vadd.f32 0.0, %v339
    %v341 = vpop.f32.mrf.mxu0
    %v342 = vpop.f32.mrf.mxu0
    %v343 = vpop.f32.mrf.mxu0
    %344 = vdwg.mxu0
    %345 = vst.msk [vmem:[#allocation7] sm:$0xff] %vm121, %v295
    %346 = vst.msk [vmem:[#allocation7 + $0x8] sm:$0xff] %vm121, %v340
    %348 = vrot.lane.b32.xlu0 %v119, 120
    %v349 = vpop.permute.xlu0 %348
    %351 = vrot.lane.b32.xlu0 %v115, 120
    %v352 = vpop.permute.xlu0 %351
    %v354 = vsel %vm121, %v349, 0
    %v357 = vsel %vm121, %v352, 0
    %359 = vmatprep.subr.bf16.mxu0 0
    %360 = vmatpush1.bf16.xpose.msra.mxu0 0
    %361 = vmatprep.subr.bf16.mxu0 0
    %362 = vmatpush1.bf16.xpose.msra.mxu0 0
    %363 = vmatprep.subr.bf16.mxu0 0
    %364 = vmatpush1.bf16.xpose.msra.mxu0 0
    %365 = vmatprep.subr.bf16.mxu0 0
    %366 = vmatpush1.bf16.xpose.msra.mxu0 0
    %367 = vmatprep.subr.bf16.mxu0 0
    %368 = vmatpush1.bf16.xpose.msra.mxu0 0
    %369 = vmatprep.subr.bf16.mxu0 0
    %370 = vmatpush1.bf16.xpose.msra.mxu0 0
    %371 = vmatprep.subr.bf16.mxu0 0
    %372 = vmatpush1.bf16.xpose.msra.mxu0 0
    %373 = vmatprep.subr.bf16.mxu0 0
    %374 = vmatpush1.bf16.xpose.msra.mxu0 %v357
    %375 = vmatprep.subr.bf16.mxu0 0
    %376 = vmatpush2.bf16.xpose.msra.mxu0 0
    %377 = vmatprep.subr.bf16.mxu0 0
    %378 = vmatpush2.bf16.xpose.msra.mxu0 0
    %379 = vmatprep.subr.bf16.mxu0 0
    %380 = vmatpush2.bf16.xpose.msra.mxu0 0
    %381 = vmatprep.subr.bf16.mxu0 0
    %382 = vmatpush2.bf16.xpose.msra.mxu0 0
    %383 = vmatprep.subr.bf16.mxu0 0
    %384 = vmatpush2.bf16.xpose.msra.mxu0 0
    %385 = vmatprep.subr.bf16.mxu0 0
    %386 = vmatpush2.bf16.xpose.msra.mxu0 0
    %387 = vmatprep.subr.bf16.mxu0 0
    %388 = vmatpush2.bf16.xpose.msra.mxu0 0
    %389 = vmatprep.subr.bf16.mxu0 0
    %390 = vmatpush2.bf16.xpose.msra.mxu0 0
    %391 = vmatprep.mubr.bf16.mxu0 0
    %392 = vmatmul.mubr.bf16.gmra.mxu0 %v354
    %v393 = vpop.f32.mrf.mxu0
    %v394 = vadd.f32 0.0, %v393
    %v395 = vpop.f32.mrf.mxu0
    %v396 = vpop.f32.mrf.mxu0
    %v397 = vpop.f32.mrf.mxu0
    %398 = vdwg.mxu0
    %400 = vrot.lane.b32.xlu0 %v120, 120
    %v401 = vpop.permute.xlu0 %400
    %403 = vrot.lane.b32.xlu0 %v116, 120
    %v404 = vpop.permute.xlu0 %403
    %v406 = vsel %vm121, %v401, 0
    %v409 = vsel %vm121, %v404, 0
    %411 = vmatprep.subr.bf16.mxu0 0
    %412 = vmatpush1.bf16.xpose.msra.mxu0 0
    %413 = vmatprep.subr.bf16.mxu0 0
    %414 = vmatpush1.bf16.xpose.msra.mxu0 0
    %415 = vmatprep.subr.bf16.mxu0 0
    %416 = vmatpush1.bf16.xpose.msra.mxu0 0
    %417 = vmatprep.subr.bf16.mxu0 0
    %418 = vmatpush1.bf16.xpose.msra.mxu0 0
    %419 = vmatprep.subr.bf16.mxu0 0
    %420 = vmatpush1.bf16.xpose.msra.mxu0 0
    %421 = vmatprep.subr.bf16.mxu0 0
    %422 = vmatpush1.bf16.xpose.msra.mxu0 0
    %423 = vmatprep.subr.bf16.mxu0 0
    %424 = vmatpush1.bf16.xpose.msra.mxu0 0
    %425 = vmatprep.subr.bf16.mxu0 0
    %426 = vmatpush1.bf16.xpose.msra.mxu0 %v409
    %427 = vmatprep.subr.bf16.mxu0 0
    %428 = vmatpush2.bf16.xpose.msra.mxu0 0
    %429 = vmatprep.subr.bf16.mxu0 0
    %430 = vmatpush2.bf16.xpose.msra.mxu0 0
    %431 = vmatprep.subr.bf16.mxu0 0
    %432 = vmatpush2.bf16.xpose.msra.mxu0 0
    %433 = vmatprep.subr.bf16.mxu0 0
    %434 = vmatpush2.bf16.xpose.msra.mxu0 0
    %435 = vmatprep.subr.bf16.mxu0 0
    %436 = vmatpush2.bf16.xpose.msra.mxu0 0
    %437 = vmatprep.subr.bf16.mxu0 0
    %438 = vmatpush2.bf16.xpose.msra.mxu0 0
    %439 = vmatprep.subr.bf16.mxu0 0
    %440 = vmatpush2.bf16.xpose.msra.mxu0 0
    %441 = vmatprep.subr.bf16.mxu0 0
    %442 = vmatpush2.bf16.xpose.msra.mxu0 0
    %443 = vmatprep.mubr.bf16.mxu0 0
    %444 = vmatmul.mubr.bf16.gmra.mxu0 %v406
    %v445 = vpop.f32.mrf.mxu0
    %v446 = vadd.f32 0.0, %v445
    %v447 = vpop.f32.mrf.mxu0
    %v448 = vpop.f32.mrf.mxu0
    %v449 = vpop.f32.mrf.mxu0
    %450 = vdwg.mxu0
    %v451 = vsel %vm121, %v394, -inf
    %v452 = vrot.slane %v451, 4
    %v453 = vmax.f32 %v451, %v452
    %v454 = vrot.slane %v453, 2
    %v455 = vmax.f32 %v453, %v454
    %v456 = vrot.slane %v455, 1
    %v457 = vmax.f32 %v455, %v456
    %v458 = vsel %vm121, %v446, -inf
    %v459 = vrot.slane %v458, 4
    %v460 = vmax.f32 %v458, %v459
    %v461 = vrot.slane %v460, 2
    %v462 = vmax.f32 %v460, %v461
    %v463 = vrot.slane %v462, 1
    %v464 = vmax.f32 %v462, %v463
    %v465 = vsub.f32 %v394, %v457
    %v466 = vsub.f32 %v446, %v464
    %v467 = vmul.f32 %v465, 1.442695
    %v468 = vpow.pop %v467
    %v469 = vmul.f32 %v466, 1.442695
    %v470 = vpow.pop %v469
    %v471 = vsel %vm121, %v468, 0.0
    %v472 = vrot.slane %v471, 4
    %v473 = vadd.f32 %v471, %v472
    %v474 = vrot.slane %v473, 2
    %v475 = vadd.f32 %v473, %v474
    %v476 = vrot.slane %v475, 1
    %v477 = vadd.f32 %v475, %v476
    %v478 = vsel %vm121, %v470, 0.0
    %v479 = vrot.slane %v478, 4
    %v480 = vadd.f32 %v478, %v479
    %v481 = vrot.slane %v480, 2
    %v482 = vadd.f32 %v480, %v481
    %v483 = vrot.slane %v482, 1
    %v484 = vadd.f32 %v482, %v483
    %v485 = vrcp.pop %v477
    %v486 = vrcp.pop %v484
    %v487 = vmul.f32 %v468, %v485
    %v488 = vmul.f32 %v470, %v486
    %v489 = vpack.c.bf16 %v487, %v487
    %v490 = vpack.c.bf16 %v488, %v488
    %v492 = vsel %vm121, %v489, 0
    %v494 = vsel %vm257, %v352, 0
    %496 = vmatprep.subr.bf16.mxu0 0
    %497 = vmatpush1.bf16.msra.mxu0 0
    %498 = vmatprep.subr.bf16.mxu0 0
    %499 = vmatpush1.bf16.msra.mxu0 0
    %500 = vmatprep.subr.bf16.mxu0 0
    %501 = vmatpush1.bf16.msra.mxu0 0
    %502 = vmatprep.subr.bf16.mxu0 0
    %503 = vmatpush1.bf16.msra.mxu0 0
    %504 = vmatprep.subr.bf16.mxu0 0
    %505 = vmatpush1.bf16.msra.mxu0 0
    %506 = vmatprep.subr.bf16.mxu0 0
    %507 = vmatpush1.bf16.msra.mxu0 0
    %508 = vmatprep.subr.bf16.mxu0 0
    %509 = vmatpush1.bf16.msra.mxu0 0
    %510 = vmatprep.subr.bf16.mxu0 0
    %511 = vmatpush1.bf16.msra.mxu0 %v494
    %512 = vmatprep.subr.bf16.mxu0 0
    %513 = vmatpush2.bf16.msra.mxu0 0
    %514 = vmatprep.subr.bf16.mxu0 0
    %515 = vmatpush2.bf16.msra.mxu0 0
    %516 = vmatprep.subr.bf16.mxu0 0
    %517 = vmatpush2.bf16.msra.mxu0 0
    %518 = vmatprep.subr.bf16.mxu0 0
    %519 = vmatpush2.bf16.msra.mxu0 0
    %520 = vmatprep.subr.bf16.mxu0 0
    %521 = vmatpush2.bf16.msra.mxu0 0
    %522 = vmatprep.subr.bf16.mxu0 0
    %523 = vmatpush2.bf16.msra.mxu0 0
    %524 = vmatprep.subr.bf16.mxu0 0
    %525 = vmatpush2.bf16.msra.mxu0 0
    %526 = vmatprep.subr.bf16.mxu0 0
    %527 = vmatpush2.bf16.msra.mxu0 0
    %528 = vmatprep.mubr.bf16.mxu0 0
    %529 = vmatmul.mubr.bf16.gmra.mxu0 %v492
    %v530 = vpop.f32.mrf.mxu0
    %v531 = vadd.f32 0.0, %v530
    %v532 = vpop.f32.mrf.mxu0
    %v533 = vpop.f32.mrf.mxu0
    %v534 = vpop.f32.mrf.mxu0
    %535 = vdwg.mxu0
    %v537 = vsel %vm121, %v490, 0
    %v539 = vsel %vm257, %v404, 0
    %541 = vmatprep.subr.bf16.mxu0 0
    %542 = vmatpush1.bf16.msra.mxu0 0
    %543 = vmatprep.subr.bf16.mxu0 0
    %544 = vmatpush1.bf16.msra.mxu0 0
    %545 = vmatprep.subr.bf16.mxu0 0
    %546 = vmatpush1.bf16.msra.mxu0 0
    %547 = vmatprep.subr.bf16.mxu0 0
    %548 = vmatpush1.bf16.msra.mxu0 0
    %549 = vmatprep.subr.bf16.mxu0 0
    %550 = vmatpush1.bf16.msra.mxu0 0
    %551 = vmatprep.subr.bf16.mxu0 0
    %552 = vmatpush1.bf16.msra.mxu0 0
    %553 = vmatprep.subr.bf16.mxu0 0
    %554 = vmatpush1.bf16.msra.mxu0 0
    %555 = vmatprep.subr.bf16.mxu0 0
    %556 = vmatpush1.bf16.msra.mxu0 %v539
    %557 = vmatprep.subr.bf16.mxu0 0
    %558 = vmatpush2.bf16.msra.mxu0 0
    %559 = vmatprep.subr.bf16.mxu0 0
    %560 = vmatpush2.bf16.msra.mxu0 0
    %561 = vmatprep.subr.bf16.mxu0 0
    %562 = vmatpush2.bf16.msra.mxu0 0
    %563 = vmatprep.subr.bf16.mxu0 0
    %564 = vmatpush2.bf16.msra.mxu0 0
    %565 = vmatprep.subr.bf16.mxu0 0
    %566 = vmatpush2.bf16.msra.mxu0 0
    %567 = vmatprep.subr.bf16.mxu0 0
    %568 = vmatpush2.bf16.msra.mxu0 0
    %569 = vmatprep.subr.bf16.mxu0 0
    %570 = vmatpush2.bf16.msra.mxu0 0
    %571 = vmatprep.subr.bf16.mxu0 0
    %572 = vmatpush2.bf16.msra.mxu0 0
    %573 = vmatprep.mubr.bf16.mxu0 0
    %574 = vmatmul.mubr.bf16.gmra.mxu0 %v537
    %v575 = vpop.f32.mrf.mxu0
    %v576 = vadd.f32 0.0, %v575
    %v577 = vpop.f32.mrf.mxu0
    %v578 = vpop.f32.mrf.mxu0
    %v579 = vpop.f32.mrf.mxu0
    %580 = vdwg.mxu0
    %583 = vrot.lane.b32.xlu0 %v531, 8
    %v584 = vpop.permute.xlu0 %583
    %585 = vrot.lane.b32.xlu0 %v576, 8
    %v586 = vpop.permute.xlu0 %585
    %vm589 = vcmask 130112
    %590 = vst.msk [vmem:[#allocation7] sm:$0xff] %vm589, %v584
    %591 = vst.msk [vmem:[#allocation7 + $0x8] sm:$0xff] %vm589, %v586
    %592 = vrot.lane.b32.xlu0 %v119, 112
    %v593 = vpop.permute.xlu0 %592
    %594 = vrot.lane.b32.xlu0 %v115, 112
    %v595 = vpop.permute.xlu0 %594
    %v597 = vsel %vm121, %v593, 0
    %v600 = vsel %vm121, %v595, 0
    %602 = vmatprep.subr.bf16.mxu0 0
    %603 = vmatpush1.bf16.xpose.msra.mxu0 0
    %604 = vmatprep.subr.bf16.mxu0 0
    %605 = vmatpush1.bf16.xpose.msra.mxu0 0
    %606 = vmatprep.subr.bf16.mxu0 0
    %607 = vmatpush1.bf16.xpose.msra.mxu0 0
    %608 = vmatprep.subr.bf16.mxu0 0
    %609 = vmatpush1.bf16.xpose.msra.mxu0 0
    %610 = vmatprep.subr.bf16.mxu0 0
    %611 = vmatpush1.bf16.xpose.msra.mxu0 0
    %612 = vmatprep.subr.bf16.mxu0 0
    %613 = vmatpush1.bf16.xpose.msra.mxu0 0
    %614 = vmatprep.subr.bf16.mxu0 0
    %615 = vmatpush1.bf16.xpose.msra.mxu0 0
    %616 = vmatprep.subr.bf16.mxu0 0
    %617 = vmatpush1.bf16.xpose.msra.mxu0 %v600
    %618 = vmatprep.subr.bf16.mxu0 0
    %619 = vmatpush2.bf16.xpose.msra.mxu0 0
    %620 = vmatprep.subr.bf16.mxu0 0
    %621 = vmatpush2.bf16.xpose.msra.mxu0 0
    %622 = vmatprep.subr.bf16.mxu0 0
    %623 = vmatpush2.bf16.xpose.msra.mxu0 0
    %624 = vmatprep.subr.bf16.mxu0 0
    %625 = vmatpush2.bf16.xpose.msra.mxu0 0
    %626 = vmatprep.subr.bf16.mxu0 0
    %627 = vmatpush2.bf16.xpose.msra.mxu0 0
    %628 = vmatprep.subr.bf16.mxu0 0
    %629 = vmatpush2.bf16.xpose.msra.mxu0 0
    %630 = vmatprep.subr.bf16.mxu0 0
    %631 = vmatpush2.bf16.xpose.msra.mxu0 0
    %632 = vmatprep.subr.bf16.mxu0 0
    %633 = vmatpush2.bf16.xpose.msra.mxu0 0
    %634 = vmatprep.mubr.bf16.mxu0 0
    %635 = vmatmul.mubr.bf16.gmra.mxu0 %v597
    %v636 = vpop.f32.mrf.mxu0
    %v637 = vadd.f32 0.0, %v636
    %v638 = vpop.f32.mrf.mxu0
    %v639 = vpop.f32.mrf.mxu0
    %v640 = vpop.f32.mrf.mxu0
    %641 = vdwg.mxu0
    %642 = vrot.lane.b32.xlu0 %v120, 112
    %v643 = vpop.permute.xlu0 %642
    %644 = vrot.lane.b32.xlu0 %v116, 112
    %v645 = vpop.permute.xlu0 %644
    %v647 = vsel %vm121, %v643, 0
    %v650 = vsel %vm121, %v645, 0
    %652 = vmatprep.subr.bf16.mxu0 0
    %653 = vmatpush1.bf16.xpose.msra.mxu0 0
    %654 = vmatprep.subr.bf16.mxu0 0
    %655 = vmatpush1.bf16.xpose.msra.mxu0 0
    %656 = vmatprep.subr.bf16.mxu0 0
    %657 = vmatpush1.bf16.xpose.msra.mxu0 0
    %658 = vmatprep.subr.bf16.mxu0 0
    %659 = vmatpush1.bf16.xpose.msra.mxu0 0
    %660 = vmatprep.subr.bf16.mxu0 0
    %661 = vmatpush1.bf16.xpose.msra.mxu0 0
    %662 = vmatprep.subr.bf16.mxu0 0
    %663 = vmatpush1.bf16.xpose.msra.mxu0 0
    %664 = vmatprep.subr.bf16.mxu0 0
    %665 = vmatpush1.bf16.xpose.msra.mxu0 0
    %666 = vmatprep.subr.bf16.mxu0 0
    %667 = vmatpush1.bf16.xpose.msra.mxu0 %v650
    %668 = vmatprep.subr.bf16.mxu0 0
    %669 = vmatpush2.bf16.xpose.msra.mxu0 0
    %670 = vmatprep.subr.bf16.mxu0 0
    %671 = vmatpush2.bf16.xpose.msra.mxu0 0
    %672 = vmatprep.subr.bf16.mxu0 0
    %673 = vmatpush2.bf16.xpose.msra.mxu0 0
    %674 = vmatprep.subr.bf16.mxu0 0
    %675 = vmatpush2.bf16.xpose.msra.mxu0 0
    %676 = vmatprep.subr.bf16.mxu0 0
    %677 = vmatpush2.bf16.xpose.msra.mxu0 0
    %678 = vmatprep.subr.bf16.mxu0 0
    %679 = vmatpush2.bf16.xpose.msra.mxu0 0
    %680 = vmatprep.subr.bf16.mxu0 0
    %681 = vmatpush2.bf16.xpose.msra.mxu0 0
    %682 = vmatprep.subr.bf16.mxu0 0
    %683 = vmatpush2.bf16.xpose.msra.mxu0 0
    %684 = vmatprep.mubr.bf16.mxu0 0
    %685 = vmatmul.mubr.bf16.gmra.mxu0 %v647
    %v686 = vpop.f32.mrf.mxu0
    %v687 = vadd.f32 0.0, %v686
    %v688 = vpop.f32.mrf.mxu0
    %v689 = vpop.f32.mrf.mxu0
    %v690 = vpop.f32.mrf.mxu0
    %691 = vdwg.mxu0
    %v692 = vsel %vm121, %v637, -inf
    %v693 = vrot.slane %v692, 4
    %v694 = vmax.f32 %v692, %v693
    %v695 = vrot.slane %v694, 2
    %v696 = vmax.f32 %v694, %v695
    %v697 = vrot.slane %v696, 1
    %v698 = vmax.f32 %v696, %v697
    %v699 = vsel %vm121, %v687, -inf
    %v700 = vrot.slane %v699, 4
    %v701 = vmax.f32 %v699, %v700
    %v702 = vrot.slane %v701, 2
    %v703 = vmax.f32 %v701, %v702
    %v704 = vrot.slane %v703, 1
    %v705 = vmax.f32 %v703, %v704
    %v706 = vsub.f32 %v637, %v698
    %v707 = vsub.f32 %v687, %v705
    %v708 = vmul.f32 %v706, 1.442695
    %v709 = vpow.pop %v708
    %v710 = vmul.f32 %v707, 1.442695
    %v711 = vpow.pop %v710
    %v712 = vsel %vm121, %v709, 0.0
    %v713 = vrot.slane %v712, 4
    %v714 = vadd.f32 %v712, %v713
    %v715 = vrot.slane %v714, 2
    %v716 = vadd.f32 %v714, %v715
    %v717 = vrot.slane %v716, 1
    %v718 = vadd.f32 %v716, %v717
    %v719 = vsel %vm121, %v711, 0.0
    %v720 = vrot.slane %v719, 4
    %v721 = vadd.f32 %v719, %v720
    %v722 = vrot.slane %v721, 2
    %v723 = vadd.f32 %v721, %v722
    %v724 = vrot.slane %v723, 1
    %v725 = vadd.f32 %v723, %v724
    %v726 = vrcp.pop %v718
    %v727 = vrcp.pop %v725
    %v728 = vmul.f32 %v709, %v726
    %v729 = vmul.f32 %v711, %v727
    %v730 = vpack.c.bf16 %v728, %v728
    %v731 = vpack.c.bf16 %v729, %v729
    %v733 = vsel %vm121, %v730, 0
    %v735 = vsel %vm257, %v595, 0
    %737 = vmatprep.subr.bf16.mxu0 0
    %738 = vmatpush1.bf16.msra.mxu0 0
    %739 = vmatprep.subr.bf16.mxu0 0
    %740 = vmatpush1.bf16.msra.mxu0 0
    %741 = vmatprep.subr.bf16.mxu0 0
    %742 = vmatpush1.bf16.msra.mxu0 0
    %743 = vmatprep.subr.bf16.mxu0 0
    %744 = vmatpush1.bf16.msra.mxu0 0
    %745 = vmatprep.subr.bf16.mxu0 0
    %746 = vmatpush1.bf16.msra.mxu0 0
    %747 = vmatprep.subr.bf16.mxu0 0
    %748 = vmatpush1.bf16.msra.mxu0 0
    %749 = vmatprep.subr.bf16.mxu0 0
    %750 = vmatpush1.bf16.msra.mxu0 0
    %751 = vmatprep.subr.bf16.mxu0 0
    %752 = vmatpush1.bf16.msra.mxu0 %v735
    %753 = vmatprep.subr.bf16.mxu0 0
    %754 = vmatpush2.bf16.msra.mxu0 0
    %755 = vmatprep.subr.bf16.mxu0 0
    %756 = vmatpush2.bf16.msra.mxu0 0
    %757 = vmatprep.subr.bf16.mxu0 0
    %758 = vmatpush2.bf16.msra.mxu0 0
    %759 = vmatprep.subr.bf16.mxu0 0
    %760 = vmatpush2.bf16.msra.mxu0 0
    %761 = vmatprep.subr.bf16.mxu0 0
    %762 = vmatpush2.bf16.msra.mxu0 0
    %763 = vmatprep.subr.bf16.mxu0 0
    %764 = vmatpush2.bf16.msra.mxu0 0
    %765 = vmatprep.subr.bf16.mxu0 0
    %766 = vmatpush2.bf16.msra.mxu0 0
    %767 = vmatprep.subr.bf16.mxu0 0
    %768 = vmatpush2.bf16.msra.mxu0 0
    %769 = vmatprep.mubr.bf16.mxu0 0
    %770 = vmatmul.mubr.bf16.gmra.mxu0 %v733
    %v771 = vpop.f32.mrf.mxu0
    %v772 = vadd.f32 0.0, %v771
    %v773 = vpop.f32.mrf.mxu0
    %v774 = vpop.f32.mrf.mxu0
    %v775 = vpop.f32.mrf.mxu0
    %776 = vdwg.mxu0
    %v778 = vsel %vm121, %v731, 0
    %v780 = vsel %vm257, %v645, 0
    %782 = vmatprep.subr.bf16.mxu0 0
    %783 = vmatpush1.bf16.msra.mxu0 0
    %784 = vmatprep.subr.bf16.mxu0 0
    %785 = vmatpush1.bf16.msra.mxu0 0
    %786 = vmatprep.subr.bf16.mxu0 0
    %787 = vmatpush1.bf16.msra.mxu0 0
    %788 = vmatprep.subr.bf16.mxu0 0
    %789 = vmatpush1.bf16.msra.mxu0 0
    %790 = vmatprep.subr.bf16.mxu0 0
    %791 = vmatpush1.bf16.msra.mxu0 0
    %792 = vmatprep.subr.bf16.mxu0 0
    %793 = vmatpush1.bf16.msra.mxu0 0
    %794 = vmatprep.subr.bf16.mxu0 0
    %795 = vmatpush1.bf16.msra.mxu0 0
    %796 = vmatprep.subr.bf16.mxu0 0
    %797 = vmatpush1.bf16.msra.mxu0 %v780
    %798 = vmatprep.subr.bf16.mxu0 0
    %799 = vmatpush2.bf16.msra.mxu0 0
    %800 = vmatprep.subr.bf16.mxu0 0
    %801 = vmatpush2.bf16.msra.mxu0 0
    %802 = vmatprep.subr.bf16.mxu0 0
    %803 = vmatpush2.bf16.msra.mxu0 0
    %804 = vmatprep.subr.bf16.mxu0 0
    %805 = vmatpush2.bf16.msra.mxu0 0
    %806 = vmatprep.subr.bf16.mxu0 0
    %807 = vmatpush2.bf16.msra.mxu0 0
    %808 = vmatprep.subr.bf16.mxu0 0
    %809 = vmatpush2.bf16.msra.mxu0 0
    %810 = vmatprep.subr.bf16.mxu0 0
    %811 = vmatpush2.bf16.msra.mxu0 0
    %812 = vmatprep.subr.bf16.mxu0 0
    %813 = vmatpush2.bf16.msra.mxu0 0
    %814 = vmatprep.mubr.bf16.mxu0 0
    %815 = vmatmul.mubr.bf16.gmra.mxu0 %v778
    %v816 = vpop.f32.mrf.mxu0
    %v817 = vadd.f32 0.0, %v816
    %v818 = vpop.f32.mrf.mxu0
    %v819 = vpop.f32.mrf.mxu0
    %v820 = vpop.f32.mrf.mxu0
    %821 = vdwg.mxu0
    %824 = vrot.lane.b32.xlu0 %v772, 16
    %v825 = vpop.permute.xlu0 %824
    %826 = vrot.lane.b32.xlu0 %v817, 16
    %v827 = vpop.permute.xlu0 %826
    %vm830 = vcmask 195712
    %831 = vst.msk [vmem:[#allocation7] sm:$0xff] %vm830, %v825
    %832 = vst.msk [vmem:[#allocation7 + $0x8] sm:$0xff] %vm830, %v827
    %833 = vrot.lane.b32.xlu0 %v119, 104
    %v834 = vpop.permute.xlu0 %833
    %835 = vrot.lane.b32.xlu0 %v115, 104
    %v836 = vpop.permute.xlu0 %835
    %v838 = vsel %vm121, %v834, 0
    %v841 = vsel %vm121, %v836, 0
    %843 = vmatprep.subr.bf16.mxu0 0
    %844 = vmatpush1.bf16.xpose.msra.mxu0 0
    %845 = vmatprep.subr.bf16.mxu0 0
    %846 = vmatpush1.bf16.xpose.msra.mxu0 0
    %847 = vmatprep.subr.bf16.mxu0 0
    %848 = vmatpush1.bf16.xpose.msra.mxu0 0
    %849 = vmatprep.subr.bf16.mxu0 0
    %850 = vmatpush1.bf16.xpose.msra.mxu0 0
    %851 = vmatprep.subr.bf16.mxu0 0
    %852 = vmatpush1.bf16.xpose.msra.mxu0 0
    %853 = vmatprep.subr.bf16.mxu0 0
    %854 = vmatpush1.bf16.xpose.msra.mxu0 0
    %855 = vmatprep.subr.bf16.mxu0 0
    %856 = vmatpush1.bf16.xpose.msra.mxu0 0
    %857 = vmatprep.subr.bf16.mxu0 0
    %858 = vmatpush1.bf16.xpose.msra.mxu0 %v841
    %859 = vmatprep.subr.bf16.mxu0 0
    %860 = vmatpush2.bf16.xpose.msra.mxu0 0
    %861 = vmatprep.subr.bf16.mxu0 0
    %862 = vmatpush2.bf16.xpose.msra.mxu0 0
    %863 = vmatprep.subr.bf16.mxu0 0
    %864 = vmatpush2.bf16.xpose.msra.mxu0 0
    %865 = vmatprep.subr.bf16.mxu0 0
    %866 = vmatpush2.bf16.xpose.msra.mxu0 0
    %867 = vmatprep.subr.bf16.mxu0 0
    %868 = vmatpush2.bf16.xpose.msra.mxu0 0
    %869 = vmatprep.subr.bf16.mxu0 0
    %870 = vmatpush2.bf16.xpose.msra.mxu0 0
    %871 = vmatprep.subr.bf16.mxu0 0
    %872 = vmatpush2.bf16.xpose.msra.mxu0 0
    %873 = vmatprep.subr.bf16.mxu0 0
    %874 = vmatpush2.bf16.xpose.msra.mxu0 0
    %875 = vmatprep.mubr.bf16.mxu0 0
    %876 = vmatmul.mubr.bf16.gmra.mxu0 %v838
    %v877 = vpop.f32.mrf.mxu0
    %v878 = vadd.f32 0.0, %v877
    %v879 = vpop.f32.mrf.mxu0
    %v880 = vpop.f32.mrf.mxu0
    %v881 = vpop.f32.mrf.mxu0
    %882 = vdwg.mxu0
    %883 = vrot.lane.b32.xlu0 %v120, 104
    %v884 = vpop.permute.xlu0 %883
    %885 = vrot.lane.b32.xlu0 %v116, 104
    %v886 = vpop.permute.xlu0 %885
    %v888 = vsel %vm121, %v884, 0
    %v891 = vsel %vm121, %v886, 0
    %893 = vmatprep.subr.bf16.mxu0 0
    %894 = vmatpush1.bf16.xpose.msra.mxu0 0
    %895 = vmatprep.subr.bf16.mxu0 0
    %896 = vmatpush1.bf16.xpose.msra.mxu0 0
    %897 = vmatprep.subr.bf16.mxu0 0
    %898 = vmatpush1.bf16.xpose.msra.mxu0 0
    %899 = vmatprep.subr.bf16.mxu0 0
    %900 = vmatpush1.bf16.xpose.msra.mxu0 0
    %901 = vmatprep.subr.bf16.mxu0 0
    %902 = vmatpush1.bf16.xpose.msra.mxu0 0
    %903 = vmatprep.subr.bf16.mxu0 0
    %904 = vmatpush1.bf16.xpose.msra.mxu0 0
    %905 = vmatprep.subr.bf16.mxu0 0
    %906 = vmatpush1.bf16.xpose.msra.mxu0 0
    %907 = vmatprep.subr.bf16.mxu0 0
    %908 = vmatpush1.bf16.xpose.msra.mxu0 %v891
    %909 = vmatprep.subr.bf16.mxu0 0
    %910 = vmatpush2.bf16.xpose.msra.mxu0 0
    %911 = vmatprep.subr.bf16.mxu0 0
    %912 = vmatpush2.bf16.xpose.msra.mxu0 0
    %913 = vmatprep.subr.bf16.mxu0 0
    %914 = vmatpush2.bf16.xpose.msra.mxu0 0
    %915 = vmatprep.subr.bf16.mxu0 0
    %916 = vmatpush2.bf16.xpose.msra.mxu0 0
    %917 = vmatprep.subr.bf16.mxu0 0
    %918 = vmatpush2.bf16.xpose.msra.mxu0 0
    %919 = vmatprep.subr.bf16.mxu0 0
    %920 = vmatpush2.bf16.xpose.msra.mxu0 0
    %921 = vmatprep.subr.bf16.mxu0 0
    %922 = vmatpush2.bf16.xpose.msra.mxu0 0
    %923 = vmatprep.subr.bf16.mxu0 0
    %924 = vmatpush2.bf16.xpose.msra.mxu0 0
    %925 = vmatprep.mubr.bf16.mxu0 0
    %926 = vmatmul.mubr.bf16.gmra.mxu0 %v888
    %v927 = vpop.f32.mrf.mxu0
    %v928 = vadd.f32 0.0, %v927
    %v929 = vpop.f32.mrf.mxu0
    %v930 = vpop.f32.mrf.mxu0
    %v931 = vpop.f32.mrf.mxu0
    %932 = vdwg.mxu0
    %v933 = vsel %vm121, %v878, -inf
    %v934 = vrot.slane %v933, 4
    %v935 = vmax.f32 %v933, %v934
    %v936 = vrot.slane %v935, 2
    %v937 = vmax.f32 %v935, %v936
    %v938 = vrot.slane %v937, 1
    %v939 = vmax.f32 %v937, %v938
    %v940 = vsel %vm121, %v928, -inf
    %v941 = vrot.slane %v940, 4
    %v942 = vmax.f32 %v940, %v941
    %v943 = vrot.slane %v942, 2
    %v944 = vmax.f32 %v942, %v943
    %v945 = vrot.slane %v944, 1
    %v946 = vmax.f32 %v944, %v945
    %v947 = vsub.f32 %v878, %v939
    %v948 = vsub.f32 %v928, %v946
    %v949 = vmul.f32 %v947, 1.442695
    %v950 = vpow.pop %v949
    %v951 = vmul.f32 %v948, 1.442695
    %v952 = vpow.pop %v951
    %v953 = vsel %vm121, %v950, 0.0
    %v954 = vrot.slane %v953, 4
    %v955 = vadd.f32 %v953, %v954
    %v956 = vrot.slane %v955, 2
    %v957 = vadd.f32 %v955, %v956
    %v958 = vrot.slane %v957, 1
    %v959 = vadd.f32 %v957, %v958
    %v960 = vsel %vm121, %v952, 0.0
    %v961 = vrot.slane %v960, 4
    %v962 = vadd.f32 %v960, %v961
    %v963 = vrot.slane %v962, 2
    %v964 = vadd.f32 %v962, %v963
    %v965 = vrot.slane %v964, 1
    %v966 = vadd.f32 %v964, %v965
    %v967 = vrcp.pop %v959
    %v968 = vrcp.pop %v966
    %v969 = vmul.f32 %v950, %v967
    %v970 = vmul.f32 %v952, %v968
    %v971 = vpack.c.bf16 %v969, %v969
    %v972 = vpack.c.bf16 %v970, %v970
    %v974 = vsel %vm121, %v971, 0
    %v976 = vsel %vm257, %v836, 0
    %978 = vmatprep.subr.bf16.mxu0 0
    %979 = vmatpush1.bf16.msra.mxu0 0
    %980 = vmatprep.subr.bf16.mxu0 0
    %981 = vmatpush1.bf16.msra.mxu0 0
    %982 = vmatprep.subr.bf16.mxu0 0
    %983 = vmatpush1.bf16.msra.mxu0 0
    %984 = vmatprep.subr.bf16.mxu0 0
    %985 = vmatpush1.bf16.msra.mxu0 0
    %986 = vmatprep.subr.bf16.mxu0 0
    %987 = vmatpush1.bf16.msra.mxu0 0
    %988 = vmatprep.subr.bf16.mxu0 0
    %989 = vmatpush1.bf16.msra.mxu0 0
    %990 = vmatprep.subr.bf16.mxu0 0
    %991 = vmatpush1.bf16.msra.mxu0 0
    %992 = vmatprep.subr.bf16.mxu0 0
    %993 = vmatpush1.bf16.msra.mxu0 %v976
    %994 = vmatprep.subr.bf16.mxu0 0
    %995 = vmatpush2.bf16.msra.mxu0 0
    %996 = vmatprep.subr.bf16.mxu0 0
    %997 = vmatpush2.bf16.msra.mxu0 0
    %998 = vmatprep.subr.bf16.mxu0 0
    %999 = vmatpush2.bf16.msra.mxu0 0
    %1000 = vmatprep.subr.bf16.mxu0 0
    %1001 = vmatpush2.bf16.msra.mxu0 0
    %1002 = vmatprep.subr.bf16.mxu0 0
    %1003 = vmatpush2.bf16.msra.mxu0 0
    %1004 = vmatprep.subr.bf16.mxu0 0
    %1005 = vmatpush2.bf16.msra.mxu0 0
    %1006 = vmatprep.subr.bf16.mxu0 0
    %1007 = vmatpush2.bf16.msra.mxu0 0
    %1008 = vmatprep.subr.bf16.mxu0 0
    %1009 = vmatpush2.bf16.msra.mxu0 0
    %1010 = vmatprep.mubr.bf16.mxu0 0
    %1011 = vmatmul.mubr.bf16.gmra.mxu0 %v974
    %v1012 = vpop.f32.mrf.mxu0
    %v1013 = vadd.f32 0.0, %v1012
    %v1014 = vpop.f32.mrf.mxu0
    %v1015 = vpop.f32.mrf.mxu0
    %v1016 = vpop.f32.mrf.mxu0
    %1017 = vdwg.mxu0
    %v1019 = vsel %vm121, %v972, 0
    %v1021 = vsel %vm257, %v886, 0
    %1023 = vmatprep.subr.bf16.mxu0 0
    %1024 = vmatpush1.bf16.msra.mxu0 0
    %1025 = vmatprep.subr.bf16.mxu0 0
    %1026 = vmatpush1.bf16.msra.mxu0 0
    %1027 = vmatprep.subr.bf16.mxu0 0
    %1028 = vmatpush1.bf16.msra.mxu0 0
    %1029 = vmatprep.subr.bf16.mxu0 0
    %1030 = vmatpush1.bf16.msra.mxu0 0
    %1031 = vmatprep.subr.bf16.mxu0 0
    %1032 = vmatpush1.bf16.msra.mxu0 0
    %1033 = vmatprep.subr.bf16.mxu0 0
    %1034 = vmatpush1.bf16.msra.mxu0 0
    %1035 = vmatprep.subr.bf16.mxu0 0
    %1036 = vmatpush1.bf16.msra.mxu0 0
    %1037 = vmatprep.subr.bf16.mxu0 0
    %1038 = vmatpush1.bf16.msra.mxu0 %v1021
    %1039 = vmatprep.subr.bf16.mxu0 0
    %1040 = vmatpush2.bf16.msra.mxu0 0
    %1041 = vmatprep.subr.bf16.mxu0 0
    %1042 = vmatpush2.bf16.msra.mxu0 0
    %1043 = vmatprep.subr.bf16.mxu0 0
    %1044 = vmatpush2.bf16.msra.mxu0 0
    %1045 = vmatprep.subr.bf16.mxu0 0
    %1046 = vmatpush2.bf16.msra.mxu0 0
    %1047 = vmatprep.subr.bf16.mxu0 0
    %1048 = vmatpush2.bf16.msra.mxu0 0
    %1049 = vmatprep.subr.bf16.mxu0 0
    %1050 = vmatpush2.bf16.msra.mxu0 0
    %1051 = vmatprep.subr.bf16.mxu0 0
    %1052 = vmatpush2.bf16.msra.mxu0 0
    %1053 = vmatprep.subr.bf16.mxu0 0
    %1054 = vmatpush2.bf16.msra.mxu0 0
    %1055 = vmatprep.mubr.bf16.mxu0 0
    %1056 = vmatmul.mubr.bf16.gmra.mxu0 %v1019
    %v1057 = vpop.f32.mrf.mxu0
    %v1058 = vadd.f32 0.0, %v1057
    %v1059 = vpop.f32.mrf.mxu0
    %v1060 = vpop.f32.mrf.mxu0
    %v1061 = vpop.f32.mrf.mxu0
    %1062 = vdwg.mxu0
    %1065 = vrot.lane.b32.xlu0 %v1013, 24
    %v1066 = vpop.permute.xlu0 %1065
    %1067 = vrot.lane.b32.xlu0 %v1058, 24
    %v1068 = vpop.permute.xlu0 %1067
    %vm1071 = vcmask 261312
    %1072 = vst.msk [vmem:[#allocation7] sm:$0xff] %vm1071, %v1066
    %1073 = vst.msk [vmem:[#allocation7 + $0x8] sm:$0xff] %vm1071, %v1068
    // Predicated region
    $region22: #{tpu_custom_call.1} parent=1 // pred_check
      _
    $region23: #{tpu_custom_call.1} parent=1 // pred_check_branch
      %1075 = sbr.rel (0) target = $region25
    $region24: #{tpu_custom_call.1} parent=1 // pred_region
      %s1077 = ssub.s32 256, 256
      %1078 = vsyncadd [#allocation4], %s1077
      %s1079 = sshll.u32 [#allocation7], 4
      %s1080 = int_to_ptr.vmem [resolvable:$true] %s1079
      %1085 = dma.vmem_to_hbm [thread:$0]  %s1080, 256, %s3, [#allocation4], 128, 128, 8
    $region25: #{tpu_custom_call.1} parent=1 // pred_fallthru
      _
    // Predicated region
    $region26: #{tpu_custom_call.1} parent=1 // pred_check
      _
    $region27: #{tpu_custom_call.1} parent=1 // pred_check_branch
      %1087 = sbr.rel (0) target = $region29
    $region28: #{tpu_custom_call.1} parent=1 // pred_region
      %1088 = dma.done [#allocation4], 256
    $region29: #{tpu_custom_call.1} parent=1 // pred_fallthru
      _
    %1089 = vsyncpa [#allocation3], 1
    %1090 = vsyncpa [#allocation6], 1
    %1091 = vsyncpa [#allocation4], 1

</llo_original>
